<compile_context>
chip_gen: v7x
topology: tpu7x:2x2x1
jax: 0.10.0
libtpu: 0.0.40
codegen_flags: <defaults>
</compile_context>

<pallas_src>
import jax
import jax.numpy as jnp
from jax.experimental import pallas as pl
from jax.experimental.pallas import tpu as pltpu


# ---------------------------------------------------------------------------
# Helpers
# ---------------------------------------------------------------------------

_VMEM_BUDGET = 40 << 20   # working-set target; fits v7x's 64 MiB physical VMEM
_VMEM_LIMIT = 48 << 20    # scoped VMEM limit (<= 64 MiB v7x, <= 128 MiB v5e/v6e)
_MAX_TILE_BYTES = 8 << 20  # per z/out buffer (Pallas double-buffers each)


def _round_up(x: int, m: int) -> int:
    return ((x + m - 1) // m) * m


def _sublane(dtype) -> int:
    # Packed-sublane min tile: 8 rows for 4-byte, 16 for 2-byte, 32 for 1-byte.
    return max(8, 32 // jnp.dtype(dtype).itemsize)


def _compute_dtype(z_dtype):
    # bf16 stays bf16 (native MXU path); everything else computes in f32.
    return jnp.bfloat16 if jnp.dtype(z_dtype) == jnp.bfloat16 else jnp.float32


def _neumann_inverse(a_raw):
    """W = (I - triu(a, 1))^{-1}, exact via nilpotency of the strict upper triangle.

    Doubling invariant: after step k, w = sum_{j < 2^(k+1)} A^j and p = A^(2^(k+1)).
    The trivial I@A product and the dead final squaring are skipped.
    NOTE: default MXU precision matched jnp.linalg.solve to ~1e-4 here; for
    tighter tolerances at large D switch these dots to lax.Precision.HIGHEST.
    """
    d = a_raw.shape[0]
    row = jax.lax.broadcasted_iota(jnp.int32, (d, d), 0)
    col = jax.lax.broadcasted_iota(jnp.int32, (d, d), 1)
    a = jnp.where(col > row, a_raw.astype(jnp.float32), 0.0)
    w = (row == col).astype(jnp.float32) + a            # I + A == sum_{j<2} A^j
    n_steps = (d - 1).bit_length() if d > 1 else 0      # 2^n_steps >= d
    if n_steps >= 2:
        p = jnp.dot(a, a, preferred_element_type=jnp.float32)      # A^2
        for step in range(1, n_steps):
            w = w + jnp.dot(w, p, preferred_element_type=jnp.float32)
            if step < n_steps - 1:                       # last squaring is dead
                p = jnp.dot(p, p, preferred_element_type=jnp.float32)
    return w


# ---------------------------------------------------------------------------
# Kernels
# ---------------------------------------------------------------------------

def _build_w_kernel(a_ref, w_ref):
    w_ref[...] = _neumann_inverse(a_ref[...]).astype(w_ref.dtype)


def _dag_apply_kernel(z_ref, w_ref, o_ref):
    # z tile and W are already in the same compute dtype (bf16 stays bf16 on
    # the MXU; no VPU up-cast), f32 accumulation, downcast only on the store.
    o_ref[...] = jnp.dot(
        z_ref[...], w_ref[...], preferred_element_type=jnp.float32
    ).astype(o_ref.dtype)


def _dag_fused_small_kernel(a_ref, z_ref, o_ref):
    # Small-problem path: build W and apply it in a single launch.
    w = _neumann_inverse(a_ref[...])
    cdt = _compute_dtype(z_ref.dtype)
    o_ref[...] = jnp.dot(
        z_ref[...], w.astype(cdt), preferred_element_type=jnp.float32
    ).astype(o_ref.dtype)


# ---------------------------------------------------------------------------
# Wrapper
# ---------------------------------------------------------------------------

def _pick_tile_rows(n_rows: int, d: int, z_dtype, w_bytes: int) -> int:
    itemsize = jnp.dtype(z_dtype).itemsize
    sub = _sublane(z_dtype)
    # Budget: 2x in + 2x out buffers + (possibly double-buffered) W.
    per_buffer = min(
        _MAX_TILE_BYTES,
        max(sub * d * itemsize, (_VMEM_BUDGET - 2 * w_bytes) // 4),
    )
    tr = per_buffer // max(1, d * itemsize)
    # Keep >= 2 grid steps so the "parallel" axis can split across v7x's 2 TCs.
    tr = min(tr, _round_up(pl.cdiv(n_rows, 2), sub))
    tr = min(tr, _round_up(n_rows, sub))
    tr = max(sub, (tr // sub) * sub)
    return tr


def _call_apply(z2d, w, tr: int, *, single_buffer_w: bool):
    n, d = z2d.shape
    w_kwargs = {}
    if single_buffer_w and hasattr(pl, "Buffered"):
        # W's index_map is constant -> one buffer halves its VMEM footprint.
        w_kwargs = dict(pipeline_mode=pl.Buffered(1))
    z_item = jnp.dtype(z2d.dtype).itemsize
    w_item = jnp.dtype(w.dtype).itemsize
    return pl.pallas_call(
        _dag_apply_kernel,
        out_shape=jax.ShapeDtypeStruct((n, d), z2d.dtype),
        grid_spec=pltpu.PrefetchScalarGridSpec(
            num_scalar_prefetch=0,
            grid=(pl.cdiv(n, tr),),
            in_specs=[
                pl.BlockSpec((tr, d), lambda i: (i, 0)),              # z row tile
                pl.BlockSpec((d, d), lambda i: (0, 0), **w_kwargs),   # resident W
            ],
            out_specs=pl.BlockSpec((tr, d), lambda i: (i, 0)),
        ),
        compiler_params=pltpu.CompilerParams(
            dimension_semantics=("parallel",),        # megacore split on v7x
            vmem_limit_bytes=_VMEM_LIMIT,
        ),
        cost_estimate=pl.CostEstimate(
            flops=2 * n * d * d,
            transcendentals=0,
            bytes_accessed=2 * n * d * z_item + d * d * w_item,
        ),
    )(z2d, w)


def dag_layer_forward(z: jax.Array, A: jax.Array) -> jax.Array:
    """DAGLayer forward: z (B, S, D), A (D, D) -> (B, S, D)."""
    B, S, D = z.shape
    assert A.shape == (D, D), f"Expected A of shape {(D, D)}, got {A.shape}"

    n = B * S
    z2d = z.reshape(n, D)                       # free view, no copy
    z_item = jnp.dtype(z.dtype).itemsize
    cdt = _compute_dtype(z.dtype)

    # ---- Small problems: single fused launch (no W HBM round trip). ----
    if D <= 512 and n * D * z_item <= (1 << 20):
        out2d = pl.pallas_call(
            _dag_fused_small_kernel,
            out_shape=jax.ShapeDtypeStruct((n, D), z.dtype),
            in_specs=[
                pl.BlockSpec((D, D), lambda: (0, 0)),
                pl.BlockSpec((n, D), lambda: (0, 0)),
            ],
            out_specs=pl.BlockSpec((n, D), lambda: (0, 0)),
        )(A, z2d)
        return out2d.reshape(B, S, D)

    # ---- Large problems: build W once, then row-tiled pipelined matmul. ----
    # TODO(synk): tile the builder (and/or stream W over a K grid axis with an
    # f32 accumulator) once ~4*D^2*4 bytes of live f32 no longer fits scoped
    # VMEM (roughly D >~ 1500 in f32).
    w = pl.pallas_call(
        _build_w_kernel,
        out_shape=jax.ShapeDtypeStruct((D, D), cdt),   # bf16 W when z is bf16
        in_specs=[pl.BlockSpec((D, D), lambda: (0, 0))],
        out_specs=pl.BlockSpec((D, D), lambda: (0, 0)),
        compiler_params=pltpu.CompilerParams(vmem_limit_bytes=_VMEM_LIMIT),
    )(A)

    w_bytes = D * D * jnp.dtype(cdt).itemsize
    tr = _pick_tile_rows(n, D, z.dtype, w_bytes)
    try:
        out2d = _call_apply(z2d, w, tr, single_buffer_w=True)
    except Exception:
        # pipeline_mode=pl.Buffered may be unavailable on older jax; the
        # default double-buffered W is functionally identical.
        out2d = _call_apply(z2d, w, tr, single_buffer_w=False)
    return out2d.reshape(B, S, D)


# ---------------------------------------------------------------------------
# Demo / self-test
# ---------------------------------------------------------------------------

if __name__ == "__main__":
    key = jax.random.PRNGKey(0)
    k_z, k_a, k_z2, k_a2 = jax.random.split(key, 4)

    def _reference(z, A):
        D = A.shape[0]
        mask = jnp.triu(jnp.ones((D, D), jnp.float32), k=1)
        I = jnp.eye(D, dtype=jnp.float32)
        zf = z.reshape(-1, D).astype(jnp.float32)
        y = jnp.linalg.solve(I - (A.astype(jnp.float32) * mask).T, zf.T).T
        return y.reshape(z.shape).astype(z.dtype)

    # Primary, module-sized example: batch=2, seq=8, dim=32 (fused path).
    B, S, D = 2, 8, 32
    z = jax.random.normal(k_z, (B, S, D), dtype=jnp.float32)
    # DAGLayer init: uniform(-0.1, 0.1) over the full (D, D) parameter.
    A = jax.random.uniform(k_a, (D, D), dtype=jnp.float32, minval=-0.1, maxval=0.1)
    y = jax.block_until_ready(dag_layer_forward(z, A))
    y_ref = _reference(z, A)
    assert y.shape == z.shape and y.dtype == z.dtype
    assert jnp.allclose(y, y_ref, atol=1e-4, rtol=1e-4), float(jnp.max(jnp.abs(y - y_ref)))

    # Secondary check exercising the tiled two-kernel path (>=2 grid steps,
    # ragged last row tile, non-128-multiple D).
    B2, S2, D2 = 3, 700, 160
    z2 = jax.random.normal(k_z2, (B2, S2, D2), dtype=jnp.float32)
    A2 = jax.random.uniform(k_a2, (D2, D2), dtype=jnp.float32, minval=-0.1, maxval=0.1)
    y2 = jax.block_until_ready(dag_layer_forward(z2, A2))
    y2_ref = _reference(z2, A2)
    assert y2.shape == z2.shape and y2.dtype == z2.dtype
    assert jnp.allclose(y2, y2_ref, atol=2e-3, rtol=2e-3), float(jnp.max(jnp.abs(y2 - y2_ref)))

    print("KERNEL_OK")
</pallas_src>

<mosaic_0001>
module attributes {stable_mosaic.version = 11 : i64} {
  func.func @_dag_fused_small_kernel(%arg0: memref<32x32xf32, #tpu.memory_space<vmem>>, %arg1: memref<16x32xf32, #tpu.memory_space<vmem>>, %arg2: memref<16x32xf32, #tpu.memory_space<vmem>>) attributes {dimension_semantics = [], scalar_prefetch = 0 : i64, scratch_operands = 0 : i64, tpu.core_type = #tpu.core_type<tc>} {
    %c0 = arith.constant 0 : index
    %c0_0 = arith.constant 0 : index
    %0 = vector.load %arg0[%c0, %c0_0] : memref<32x32xf32, #tpu.memory_space<vmem>>, vector<32x32xf32>
    %1 = tpu.iota {dimensions = array<i32: 0>} : vector<32x32xi32>
    %2 = tpu.iota {dimensions = array<i32: 1>} : vector<32x32xi32>
    %3 = arith.cmpi sgt, %2, %1 : vector<32x32xi32>
    %cst = arith.constant 0.000000e+00 : f32
    %4 = vector.broadcast %cst : f32 to vector<32x32xf32>
    %5 = arith.select %3, %0, %4 : vector<32x32xi1>, vector<32x32xf32>
    %6 = arith.cmpi eq, %1, %2 : vector<32x32xi32>
    %7 = arith.extui %6 : vector<32x32xi1> to vector<32x32xi32>
    %8 = arith.sitofp %7 : vector<32x32xi32> to vector<32x32xf32>
    %9 = arith.addf %8, %5 : vector<32x32xf32>
    %cst_1 = arith.constant dense<0.000000e+00> : vector<32x32xf32>
    %10 = tpu.matmul %5, %5, %cst_1 {dimension_numbers = #tpu.dot_dimension_numbers<[1], [0], [0], [1], [0, 0, 1, 1], [], []>} : vector<32x32xf32>, vector<32x32xf32>, vector<32x32xf32> -> vector<32x32xf32>
    %cst_2 = arith.constant dense<0.000000e+00> : vector<32x32xf32>
    %11 = tpu.matmul %9, %10, %cst_2 {dimension_numbers = #tpu.dot_dimension_numbers<[1], [0], [0], [1], [0, 0, 1, 1], [], []>} : vector<32x32xf32>, vector<32x32xf32>, vector<32x32xf32> -> vector<32x32xf32>
    %12 = arith.addf %9, %11 : vector<32x32xf32>
    %cst_3 = arith.constant dense<0.000000e+00> : vector<32x32xf32>
    %13 = tpu.matmul %10, %10, %cst_3 {dimension_numbers = #tpu.dot_dimension_numbers<[1], [0], [0], [1], [0, 0, 1, 1], [], []>} : vector<32x32xf32>, vector<32x32xf32>, vector<32x32xf32> -> vector<32x32xf32>
    %cst_4 = arith.constant dense<0.000000e+00> : vector<32x32xf32>
    %14 = tpu.matmul %12, %13, %cst_4 {dimension_numbers = #tpu.dot_dimension_numbers<[1], [0], [0], [1], [0, 0, 1, 1], [], []>} : vector<32x32xf32>, vector<32x32xf32>, vector<32x32xf32> -> vector<32x32xf32>
    %15 = arith.addf %12, %14 : vector<32x32xf32>
    %cst_5 = arith.constant dense<0.000000e+00> : vector<32x32xf32>
    %16 = tpu.matmul %13, %13, %cst_5 {dimension_numbers = #tpu.dot_dimension_numbers<[1], [0], [0], [1], [0, 0, 1, 1], [], []>} : vector<32x32xf32>, vector<32x32xf32>, vector<32x32xf32> -> vector<32x32xf32>
    %cst_6 = arith.constant dense<0.000000e+00> : vector<32x32xf32>
    %17 = tpu.matmul %15, %16, %cst_6 {dimension_numbers = #tpu.dot_dimension_numbers<[1], [0], [0], [1], [0, 0, 1, 1], [], []>} : vector<32x32xf32>, vector<32x32xf32>, vector<32x32xf32> -> vector<32x32xf32>
    %18 = arith.addf %15, %17 : vector<32x32xf32>
    %cst_7 = arith.constant dense<0.000000e+00> : vector<32x32xf32>
    %19 = tpu.matmul %16, %16, %cst_7 {dimension_numbers = #tpu.dot_dimension_numbers<[1], [0], [0], [1], [0, 0, 1, 1], [], []>} : vector<32x32xf32>, vector<32x32xf32>, vector<32x32xf32> -> vector<32x32xf32>
    %cst_8 = arith.constant dense<0.000000e+00> : vector<32x32xf32>
    %20 = tpu.matmul %18, %19, %cst_8 {dimension_numbers = #tpu.dot_dimension_numbers<[1], [0], [0], [1], [0, 0, 1, 1], [], []>} : vector<32x32xf32>, vector<32x32xf32>, vector<32x32xf32> -> vector<32x32xf32>
    %21 = arith.addf %18, %20 : vector<32x32xf32>
    %c0_9 = arith.constant 0 : index
    %c0_10 = arith.constant 0 : index
    %22 = vector.load %arg1[%c0_9, %c0_10] : memref<16x32xf32, #tpu.memory_space<vmem>>, vector<16x32xf32>
    %cst_11 = arith.constant dense<0.000000e+00> : vector<16x32xf32>
    %23 = tpu.matmul %22, %21, %cst_11 {dimension_numbers = #tpu.dot_dimension_numbers<[1], [0], [0], [1], [0, 0, 1, 1], [], []>} : vector<16x32xf32>, vector<32x32xf32>, vector<16x32xf32> -> vector<16x32xf32>
    %c0_12 = arith.constant 0 : index
    %c0_13 = arith.constant 0 : index
    %24 = vector.load %arg2[%c0_12, %c0_13] : memref<16x32xf32, #tpu.memory_space<vmem>>, vector<16x32xf32>
    tpu.vector_store %arg2[%c0_12, %c0_13], %23 {strides = array<i32>} : memref<16x32xf32, #tpu.memory_space<vmem>>, vector<16x32xf32>,
    return
  }
}

</mosaic_0001>

<llo_original>
// kernel: tpu_custom_call.1
$region0: #{tpu_custom_call.1}
  #allocation0 [shape = 'u32[]', space=smem, size = 0x4, offset = 0x4, fixed_abs, tag = 'smem constant byte address 0x4 - core index']
  #allocation1 [shape = 'u32[144,128]{1,0:T(1,128)}', space=vmem, size = 0x12000, scoped, tag = 'internal scratch']
  %s0 = inlined_call_operand.hbm [shape: f32[32,32], index: 0, kind: input, shape index: {}]
  %s1 = inlined_call_operand.hbm [shape: f32[16,32], index: 1, kind: input, shape index: {}]
  %s2 = inlined_call_operand.hbm [shape: f32[16,32], index: 2, kind: output, shape index: {}]
  %s3 = sld [smem:[#allocation0]]
  $region26: #{tpu_custom_call.1} parent=0
    _
  %s5 = ssub.s32 1, %s3
  %s6 = scalar_select 0, %s5, %s3
  $region1: #{tpu_custom_call.1} parent=0
    #allocation2 [shape = 'u8[16384]{0}', space=vmem, size = 0x4000, scoped, tag = 'input window, operand 0, single buffered']
    #allocation3 [shape = 's32[1]{0}', space=sflag, size = 0x4, scoped, tag = 'scoped memory for tpu_custom_call.1']
    #allocation4 [shape = 's32[1]{0}', space=sflag, size = 0x4, scoped, tag = 'scoped memory for tpu_custom_call.1']
    #allocation5 [shape = 'u8[8192]{0}', space=vmem, size = 0x2000, scoped, tag = 'input window, operand 1, single buffered']
    #allocation6 [shape = 's32[1]{0}', space=sflag, size = 0x4, scoped, tag = 'scoped memory for tpu_custom_call.1']
    #allocation7 [shape = 'u8[8192]{0}', space=vmem, size = 0x2000, scoped, tag = 'output window, operand 0, single buffered']
    %7 = vsyncpa [#allocation3], 0
    %8 = vsyncpa [#allocation6], 0
    %9 = vsyncpa [#allocation4], 0
    // Predicated region
    $region2: #{tpu_custom_call.1} parent=1 // pred_check
      _
    $region3: #{tpu_custom_call.1} parent=1 // pred_check_branch
      %11 = sbr.rel (0) target = $region5
    $region4: #{tpu_custom_call.1} parent=1 // pred_region
      %s13 = ssub.s32 512, 512
      %14 = vsyncadd [#allocation3], %s13
      %s15 = sshll.u32 [#allocation2], 4
      %s16 = int_to_ptr.vmem [resolvable:$true] %s15
      %21 = dma.hbm_to_vmem [thread:$0]  %s0, 512, %s16, [#allocation3], 128, 128, 8
    $region5: #{tpu_custom_call.1} parent=1 // pred_fallthru
      _
    // Predicated region
    $region6: #{tpu_custom_call.1} parent=1 // pred_check
      _
    $region7: #{tpu_custom_call.1} parent=1 // pred_check_branch
      %23 = sbr.rel (0) target = $region9
    $region8: #{tpu_custom_call.1} parent=1 // pred_region
      %s25 = ssub.s32 256, 256
      %26 = vsyncadd [#allocation6], %s25
      %s27 = sshll.u32 [#allocation5], 4
      %s28 = int_to_ptr.vmem [resolvable:$true] %s27
      %33 = dma.hbm_to_vmem [thread:$0]  %s1, 256, %s28, [#allocation6], 128, 128, 8
    $region9: #{tpu_custom_call.1} parent=1 // pred_fallthru
      _
    // Predicated region
    $region10: #{tpu_custom_call.1} parent=1 // pred_check
      _
    $region11: #{tpu_custom_call.1} parent=1 // pred_check_branch
      %35 = sbr.rel (0) target = $region13
    $region12: #{tpu_custom_call.1} parent=1 // pred_region
      %36 = dma.done [#allocation3], 512
    $region13: #{tpu_custom_call.1} parent=1 // pred_fallthru
      _
    // Predicated region
    $region14: #{tpu_custom_call.1} parent=1 // pred_check
      _
    $region15: #{tpu_custom_call.1} parent=1 // pred_check_branch
      %38 = sbr.rel (0) target = $region17
    $region16: #{tpu_custom_call.1} parent=1 // pred_region
      %39 = dma.done [#allocation6], 256
    $region17: #{tpu_custom_call.1} parent=1 // pred_fallthru
      _
    %v40 = vld [vmem:[#allocation2] sm:$0xff]
    %v41 = vld [vmem:[#allocation2 + $0x8] sm:$0xff]
    %v42 = vld [vmem:[#allocation2 + $0x10] sm:$0xff]
    %v43 = vld [vmem:[#allocation2 + $0x18] sm:$0xff]
    %v44 = vlaneseq
    %v45 = vshrl.u32 %v44, 7
    %v46 = vadd.s32 %v45, 8
    %v47 = vadd.s32 %v45, 16
    %v48 = vadd.s32 %v45, 24
    %v49 = vlaneseq
    %v50 = vand.u32 %v49, 127
    %vm51 = vcmp.gt.s32.totalorder %v50, %v45
    %vm52 = vcmp.gt.s32.totalorder %v50, %v46
    %vm53 = vcmp.gt.s32.totalorder %v50, %v47
    %vm54 = vcmp.gt.s32.totalorder %v50, %v48
    %v55 = vsel %vm51, %v40, 0.0
    %v56 = vsel %vm52, %v41, 0.0
    %v57 = vsel %vm53, %v42, 0.0
    %v58 = vsel %vm54, %v43, 0.0
    %vm59 = vcmp.eq.s32.totalorder %v45, %v50
    %vm60 = vcmp.eq.s32.totalorder %v46, %v50
    %vm61 = vcmp.eq.s32.totalorder %v47, %v50
    %vm62 = vcmp.eq.s32.totalorder %v48, %v50
    %v63 = vsel %vm59, 1, 0
    %v64 = vsel %vm60, 1, 0
    %v65 = vsel %vm61, 1, 0
    %v66 = vsel %vm62, 1, 0
    %v67 = vcvt.s32.f32 %v63
    %v68 = vcvt.s32.f32 %v64
    %v69 = vcvt.s32.f32 %v65
    %v70 = vcvt.s32.f32 %v66
    %v71 = vadd.f32 %v67, %v55
    %v72 = vadd.f32 %v68, %v56
    %v73 = vadd.f32 %v69, %v57
    %v74 = vadd.f32 %v70, %v58
    %vm75 = vcmask 261120
    %v77 = vsel %vm75, %v55, 0
    %v80 = vsel %vm75, %v56, 0
    %v83 = vsel %vm75, %v57, 0
    %v86 = vsel %vm75, %v58, 0
    %88 = vmatprep.subr.mxu0 0.0
    %89 = vmatpush1.msra.mxu0 %v55
    %90 = vmatprep.subr.mxu0 0.0
    %91 = vmatpush1.msra.mxu0 %v56
    %92 = vmatprep.subr.mxu0 0.0
    %93 = vmatpush1.msra.mxu0 %v57
    %94 = vmatprep.subr.mxu0 0.0
    %95 = vmatpush1.msra.mxu0 %v58
    %96 = vmatprep.subr.mxu0 0.0
    %97 = vmatpush1.msra.mxu0 0.0
    %98 = vmatprep.subr.mxu0 0.0
    %99 = vmatpush1.msra.mxu0 0.0
    %100 = vmatprep.subr.mxu0 0.0
    %101 = vmatpush1.msra.mxu0 0.0
    %102 = vmatprep.subr.mxu0 0.0
    %103 = vmatpush1.msra.mxu0 0.0
    %104 = vmatprep.subr.mxu0 0.0
    %105 = vmatpush1.msra.mxu0 0.0
    %106 = vmatprep.subr.mxu0 0.0
    %107 = vmatpush1.msra.mxu0 0.0
    %108 = vmatprep.subr.mxu0 0.0
    %109 = vmatpush1.msra.mxu0 0.0
    %110 = vmatprep.subr.mxu0 0.0
    %111 = vmatpush1.msra.mxu0 0.0
    %112 = vmatprep.subr.mxu0 0.0
    %113 = vmatpush1.msra.mxu0 0.0
    %114 = vmatprep.subr.mxu0 0.0
    %115 = vmatpush1.msra.mxu0 0.0
    %116 = vmatprep.subr.mxu0 0.0
    %117 = vmatpush1.msra.mxu0 0.0
    %118 = vmatprep.subr.mxu0 0.0
    %119 = vmatpush1.msra.mxu0 0.0
    %120 = vmatprep.subr.mxu0 0.0
    %121 = vmatpush1.msra.mxu0 0.0
    %122 = vmatprep.subr.mxu0 0.0
    %123 = vmatpush1.msra.mxu0 0.0
    %124 = vmatprep.subr.mxu0 0.0
    %125 = vmatpush1.msra.mxu0 0.0
    %126 = vmatprep.subr.mxu0 0.0
    %127 = vmatpush1.msra.mxu0 0.0
    %128 = vmatprep.subr.mxu0 0.0
    %129 = vmatpush1.msra.mxu0 0.0
    %130 = vmatprep.subr.mxu0 0.0
    %131 = vmatpush1.msra.mxu0 0.0
    %132 = vmatprep.subr.mxu0 0.0
    %133 = vmatpush1.msra.mxu0 0.0
    %134 = vmatprep.subr.mxu0 0.0
    %135 = vmatpush1.msra.mxu0 0.0
    %136 = vmatprep.subr.mxu0 0.0
    %137 = vmatpush1.msra.mxu0 0.0
    %138 = vmatprep.subr.mxu0 0.0
    %139 = vmatpush1.msra.mxu0 0.0
    %140 = vmatprep.subr.mxu0 0.0
    %141 = vmatpush1.msra.mxu0 0.0
    %142 = vmatprep.subr.mxu0 0.0
    %143 = vmatpush1.msra.mxu0 0.0
    %144 = vmatprep.subr.mxu0 0.0
    %145 = vmatpush1.msra.mxu0 0.0
    %146 = vmatprep.subr.mxu0 0.0
    %147 = vmatpush1.msra.mxu0 0.0
    %148 = vmatprep.subr.mxu0 0.0
    %149 = vmatpush1.msra.mxu0 0.0
    %150 = vmatprep.subr.mxu0 0.0
    %151 = vmatpush1.msra.mxu0 0.0
    %152 = vmatprep.mubr.f32.mxu0 0.0
    %153 = vmatmul.mubr.f32.gmra.mrb[0].mxu0 %v77
    %v154 = vpop.f32.mrb[0].mxu0
    %v155 = vadd.f32 0.0, %v154
    %v156 = vpop.f32.mrb[0].mxu0
    %157 = vmatprep.mubr.f32.mxu0 0.0
    %158 = vmatmul.mubr.f32.gmra.mrb[0].mxu0 %v80
    %v159 = vpop.f32.mrb[0].mxu0
    %v160 = vadd.f32 0.0, %v159
    %v161 = vpop.f32.mrb[0].mxu0
    %162 = vmatprep.mubr.f32.mxu0 0.0
    %163 = vmatmul.mubr.f32.gmra.mrb[0].mxu0 %v83
    %v164 = vpop.f32.mrb[0].mxu0
    %v165 = vadd.f32 0.0, %v164
    %v166 = vpop.f32.mrb[0].mxu0
    %167 = vmatprep.mubr.f32.mxu0 0.0
    %168 = vmatmul.mubr.f32.gmra.mrb[0].mxu0 %v86
    %v169 = vpop.f32.mrb[0].mxu0
    %v170 = vadd.f32 0.0, %v169
    %v171 = vpop.f32.mrb[0].mxu0
    %172 = vdwg.mxu0
    %v174 = vsel %vm75, %v71, 0
    %v177 = vsel %vm75, %v72, 0
    %v180 = vsel %vm75, %v73, 0
    %v183 = vsel %vm75, %v74, 0
    %185 = vmatprep.subr.mxu0 0.0
    %186 = vmatpush1.msra.mxu0 %v155
    %187 = vmatprep.subr.mxu0 0.0
    %188 = vmatpush1.msra.mxu0 %v160
    %189 = vmatprep.subr.mxu0 0.0
    %190 = vmatpush1.msra.mxu0 %v165
    %191 = vmatprep.subr.mxu0 0.0
    %192 = vmatpush1.msra.mxu0 %v170
    %193 = vmatprep.subr.mxu0 0.0
    %194 = vmatpush1.msra.mxu0 0.0
    %195 = vmatprep.subr.mxu0 0.0
    %196 = vmatpush1.msra.mxu0 0.0
    %197 = vmatprep.subr.mxu0 0.0
    %198 = vmatpush1.msra.mxu0 0.0
    %199 = vmatprep.subr.mxu0 0.0
    %200 = vmatpush1.msra.mxu0 0.0
    %201 = vmatprep.subr.mxu0 0.0
    %202 = vmatpush1.msra.mxu0 0.0
    %203 = vmatprep.subr.mxu0 0.0
    %204 = vmatpush1.msra.mxu0 0.0
    %205 = vmatprep.subr.mxu0 0.0
    %206 = vmatpush1.msra.mxu0 0.0
    %207 = vmatprep.subr.mxu0 0.0
    %208 = vmatpush1.msra.mxu0 0.0
    %209 = vmatprep.subr.mxu0 0.0
    %210 = vmatpush1.msra.mxu0 0.0
    %211 = vmatprep.subr.mxu0 0.0
    %212 = vmatpush1.msra.mxu0 0.0
    %213 = vmatprep.subr.mxu0 0.0
    %214 = vmatpush1.msra.mxu0 0.0
    %215 = vmatprep.subr.mxu0 0.0
    %216 = vmatpush1.msra.mxu0 0.0
    %217 = vmatprep.subr.mxu0 0.0
    %218 = vmatpush1.msra.mxu0 0.0
    %219 = vmatprep.subr.mxu0 0.0
    %220 = vmatpush1.msra.mxu0 0.0
    %221 = vmatprep.subr.mxu0 0.0
    %222 = vmatpush1.msra.mxu0 0.0
    %223 = vmatprep.subr.mxu0 0.0
    %224 = vmatpush1.msra.mxu0 0.0
    %225 = vmatprep.subr.mxu0 0.0
    %226 = vmatpush1.msra.mxu0 0.0
    %227 = vmatprep.subr.mxu0 0.0
    %228 = vmatpush1.msra.mxu0 0.0
    %229 = vmatprep.subr.mxu0 0.0
    %230 = vmatpush1.msra.mxu0 0.0
    %231 = vmatprep.subr.mxu0 0.0
    %232 = vmatpush1.msra.mxu0 0.0
    %233 = vmatprep.subr.mxu0 0.0
    %234 = vmatpush1.msra.mxu0 0.0
    %235 = vmatprep.subr.mxu0 0.0
    %236 = vmatpush1.msra.mxu0 0.0
    %237 = vmatprep.subr.mxu0 0.0
    %238 = vmatpush1.msra.mxu0 0.0
    %239 = vmatprep.subr.mxu0 0.0
    %240 = vmatpush1.msra.mxu0 0.0
    %241 = vmatprep.subr.mxu0 0.0
    %242 = vmatpush1.msra.mxu0 0.0
    %243 = vmatprep.subr.mxu0 0.0
    %244 = vmatpush1.msra.mxu0 0.0
    %245 = vmatprep.subr.mxu0 0.0
    %246 = vmatpush1.msra.mxu0 0.0
    %247 = vmatprep.subr.mxu0 0.0
    %248 = vmatpush1.msra.mxu0 0.0
    %249 = vmatprep.mubr.f32.mxu0 0.0
    %250 = vmatmul.mubr.f32.gmra.mrb[0].mxu0 %v174
    %v251 = vpop.f32.mrb[0].mxu0
    %v252 = vadd.f32 0.0, %v251
    %v253 = vpop.f32.mrb[0].mxu0
    %254 = vmatprep.mubr.f32.mxu0 0.0
    %255 = vmatmul.mubr.f32.gmra.mrb[0].mxu0 %v177
    %v256 = vpop.f32.mrb[0].mxu0
    %v257 = vadd.f32 0.0, %v256
    %v258 = vpop.f32.mrb[0].mxu0
    %259 = vmatprep.mubr.f32.mxu0 0.0
    %260 = vmatmul.mubr.f32.gmra.mrb[0].mxu0 %v180
    %v261 = vpop.f32.mrb[0].mxu0
    %v262 = vadd.f32 0.0, %v261
    %v263 = vpop.f32.mrb[0].mxu0
    %264 = vmatprep.mubr.f32.mxu0 0.0
    %265 = vmatmul.mubr.f32.gmra.mrb[0].mxu0 %v183
    %v266 = vpop.f32.mrb[0].mxu0
    %v267 = vadd.f32 0.0, %v266
    %v268 = vpop.f32.mrb[0].mxu0
    %269 = vdwg.mxu0
    %v270 = vadd.f32 %v71, %v252
    %v271 = vadd.f32 %v72, %v257
    %v272 = vadd.f32 %v73, %v262
    %v273 = vadd.f32 %v74, %v267
    %v275 = vsel %vm75, %v155, 0
    %v278 = vsel %vm75, %v160, 0
    %v281 = vsel %vm75, %v165, 0
    %v284 = vsel %vm75, %v170, 0
    %286 = vmatprep.subr.mxu0 0.0
    %287 = vmatpush1.msra.mxu0 %v155
    %288 = vmatprep.subr.mxu0 0.0
    %289 = vmatpush1.msra.mxu0 %v160
    %290 = vmatprep.subr.mxu0 0.0
    %291 = vmatpush1.msra.mxu0 %v165
    %292 = vmatprep.subr.mxu0 0.0
    %293 = vmatpush1.msra.mxu0 %v170
    %294 = vmatprep.subr.mxu0 0.0
    %295 = vmatpush1.msra.mxu0 0.0
    %296 = vmatprep.subr.mxu0 0.0
    %297 = vmatpush1.msra.mxu0 0.0
    %298 = vmatprep.subr.mxu0 0.0
    %299 = vmatpush1.msra.mxu0 0.0
    %300 = vmatprep.subr.mxu0 0.0
    %301 = vmatpush1.msra.mxu0 0.0
    %302 = vmatprep.subr.mxu0 0.0
    %303 = vmatpush1.msra.mxu0 0.0
    %304 = vmatprep.subr.mxu0 0.0
    %305 = vmatpush1.msra.mxu0 0.0
    %306 = vmatprep.subr.mxu0 0.0
    %307 = vmatpush1.msra.mxu0 0.0
    %308 = vmatprep.subr.mxu0 0.0
    %309 = vmatpush1.msra.mxu0 0.0
    %310 = vmatprep.subr.mxu0 0.0
    %311 = vmatpush1.msra.mxu0 0.0
    %312 = vmatprep.subr.mxu0 0.0
    %313 = vmatpush1.msra.mxu0 0.0
    %314 = vmatprep.subr.mxu0 0.0
    %315 = vmatpush1.msra.mxu0 0.0
    %316 = vmatprep.subr.mxu0 0.0
    %317 = vmatpush1.msra.mxu0 0.0
    %318 = vmatprep.subr.mxu0 0.0
    %319 = vmatpush1.msra.mxu0 0.0
    %320 = vmatprep.subr.mxu0 0.0
    %321 = vmatpush1.msra.mxu0 0.0
    %322 = vmatprep.subr.mxu0 0.0
    %323 = vmatpush1.msra.mxu0 0.0
    %324 = vmatprep.subr.mxu0 0.0
    %325 = vmatpush1.msra.mxu0 0.0
    %326 = vmatprep.subr.mxu0 0.0
    %327 = vmatpush1.msra.mxu0 0.0
    %328 = vmatprep.subr.mxu0 0.0
    %329 = vmatpush1.msra.mxu0 0.0
    %330 = vmatprep.subr.mxu0 0.0
    %331 = vmatpush1.msra.mxu0 0.0
    %332 = vmatprep.subr.mxu0 0.0
    %333 = vmatpush1.msra.mxu0 0.0
    %334 = vmatprep.subr.mxu0 0.0
    %335 = vmatpush1.msra.mxu0 0.0
    %336 = vmatprep.subr.mxu0 0.0
    %337 = vmatpush1.msra.mxu0 0.0
    %338 = vmatprep.subr.mxu0 0.0
    %339 = vmatpush1.msra.mxu0 0.0
    %340 = vmatprep.subr.mxu0 0.0
    %341 = vmatpush1.msra.mxu0 0.0
    %342 = vmatprep.subr.mxu0 0.0
    %343 = vmatpush1.msra.mxu0 0.0
    %344 = vmatprep.subr.mxu0 0.0
    %345 = vmatpush1.msra.mxu0 0.0
    %346 = vmatprep.subr.mxu0 0.0
    %347 = vmatpush1.msra.mxu0 0.0
    %348 = vmatprep.subr.mxu0 0.0
    %349 = vmatpush1.msra.mxu0 0.0
    %350 = vmatprep.mubr.f32.mxu0 0.0
    %351 = vmatmul.mubr.f32.gmra.mrb[0].mxu0 %v275
    %v352 = vpop.f32.mrb[0].mxu0
    %v353 = vadd.f32 0.0, %v352
    %v354 = vpop.f32.mrb[0].mxu0
    %355 = vmatprep.mubr.f32.mxu0 0.0
    %356 = vmatmul.mubr.f32.gmra.mrb[0].mxu0 %v278
    %v357 = vpop.f32.mrb[0].mxu0
    %v358 = vadd.f32 0.0, %v357
    %v359 = vpop.f32.mrb[0].mxu0
    %360 = vmatprep.mubr.f32.mxu0 0.0
    %361 = vmatmul.mubr.f32.gmra.mrb[0].mxu0 %v281
    %v362 = vpop.f32.mrb[0].mxu0
    %v363 = vadd.f32 0.0, %v362
    %v364 = vpop.f32.mrb[0].mxu0
    %365 = vmatprep.mubr.f32.mxu0 0.0
    %366 = vmatmul.mubr.f32.gmra.mrb[0].mxu0 %v284
    %v367 = vpop.f32.mrb[0].mxu0
    %v368 = vadd.f32 0.0, %v367
    %v369 = vpop.f32.mrb[0].mxu0
    %370 = vdwg.mxu0
    %v372 = vsel %vm75, %v270, 0
    %v375 = vsel %vm75, %v271, 0
    %v378 = vsel %vm75, %v272, 0
    %v381 = vsel %vm75, %v273, 0
    %383 = vmatprep.subr.mxu0 0.0
    %384 = vmatpush1.msra.mxu0 %v353
    %385 = vmatprep.subr.mxu0 0.0
    %386 = vmatpush1.msra.mxu0 %v358
    %387 = vmatprep.subr.mxu0 0.0
    %388 = vmatpush1.msra.mxu0 %v363
    %389 = vmatprep.subr.mxu0 0.0
    %390 = vmatpush1.msra.mxu0 %v368
    %391 = vmatprep.subr.mxu0 0.0
    %392 = vmatpush1.msra.mxu0 0.0
    %393 = vmatprep.subr.mxu0 0.0
    %394 = vmatpush1.msra.mxu0 0.0
    %395 = vmatprep.subr.mxu0 0.0
    %396 = vmatpush1.msra.mxu0 0.0
    %397 = vmatprep.subr.mxu0 0.0
    %398 = vmatpush1.msra.mxu0 0.0
    %399 = vmatprep.subr.mxu0 0.0
    %400 = vmatpush1.msra.mxu0 0.0
    %401 = vmatprep.subr.mxu0 0.0
    %402 = vmatpush1.msra.mxu0 0.0
    %403 = vmatprep.subr.mxu0 0.0
    %404 = vmatpush1.msra.mxu0 0.0
    %405 = vmatprep.subr.mxu0 0.0
    %406 = vmatpush1.msra.mxu0 0.0
    %407 = vmatprep.subr.mxu0 0.0
    %408 = vmatpush1.msra.mxu0 0.0
    %409 = vmatprep.subr.mxu0 0.0
    %410 = vmatpush1.msra.mxu0 0.0
    %411 = vmatprep.subr.mxu0 0.0
    %412 = vmatpush1.msra.mxu0 0.0
    %413 = vmatprep.subr.mxu0 0.0
    %414 = vmatpush1.msra.mxu0 0.0
    %415 = vmatprep.subr.mxu0 0.0
    %416 = vmatpush1.msra.mxu0 0.0
    %417 = vmatprep.subr.mxu0 0.0
    %418 = vmatpush1.msra.mxu0 0.0
    %419 = vmatprep.subr.mxu0 0.0
    %420 = vmatpush1.msra.mxu0 0.0
    %421 = vmatprep.subr.mxu0 0.0
    %422 = vmatpush1.msra.mxu0 0.0
    %423 = vmatprep.subr.mxu0 0.0
    %424 = vmatpush1.msra.mxu0 0.0
    %425 = vmatprep.subr.mxu0 0.0
    %426 = vmatpush1.msra.mxu0 0.0
    %427 = vmatprep.subr.mxu0 0.0
    %428 = vmatpush1.msra.mxu0 0.0
    %429 = vmatprep.subr.mxu0 0.0
    %430 = vmatpush1.msra.mxu0 0.0
    %431 = vmatprep.subr.mxu0 0.0
    %432 = vmatpush1.msra.mxu0 0.0
    %433 = vmatprep.subr.mxu0 0.0
    %434 = vmatpush1.msra.mxu0 0.0
    %435 = vmatprep.subr.mxu0 0.0
    %436 = vmatpush1.msra.mxu0 0.0
    %437 = vmatprep.subr.mxu0 0.0
    %438 = vmatpush1.msra.mxu0 0.0
    %439 = vmatprep.subr.mxu0 0.0
    %440 = vmatpush1.msra.mxu0 0.0
    %441 = vmatprep.subr.mxu0 0.0
    %442 = vmatpush1.msra.mxu0 0.0
    %443 = vmatprep.subr.mxu0 0.0
    %444 = vmatpush1.msra.mxu0 0.0
    %445 = vmatprep.subr.mxu0 0.0
    %446 = vmatpush1.msra.mxu0 0.0
    %447 = vmatprep.mubr.f32.mxu0 0.0
    %448 = vmatmul.mubr.f32.gmra.mrb[0].mxu0 %v372
    %v449 = vpop.f32.mrb[0].mxu0
    %v450 = vadd.f32 0.0, %v449
    %v451 = vpop.f32.mrb[0].mxu0
    %452 = vmatprep.mubr.f32.mxu0 0.0
    %453 = vmatmul.mubr.f32.gmra.mrb[0].mxu0 %v375
    %v454 = vpop.f32.mrb[0].mxu0
    %v455 = vadd.f32 0.0, %v454
    %v456 = vpop.f32.mrb[0].mxu0
    %457 = vmatprep.mubr.f32.mxu0 0.0
    %458 = vmatmul.mubr.f32.gmra.mrb[0].mxu0 %v378
    %v459 = vpop.f32.mrb[0].mxu0
    %v460 = vadd.f32 0.0, %v459
    %v461 = vpop.f32.mrb[0].mxu0
    %462 = vmatprep.mubr.f32.mxu0 0.0
    %463 = vmatmul.mubr.f32.gmra.mrb[0].mxu0 %v381
    %v464 = vpop.f32.mrb[0].mxu0
    %v465 = vadd.f32 0.0, %v464
    %v466 = vpop.f32.mrb[0].mxu0
    %467 = vdwg.mxu0
    %v468 = vadd.f32 %v270, %v450
    %v469 = vadd.f32 %v271, %v455
    %v470 = vadd.f32 %v272, %v460
    %v471 = vadd.f32 %v273, %v465
    %v473 = vsel %vm75, %v353, 0
    %v476 = vsel %vm75, %v358, 0
    %v479 = vsel %vm75, %v363, 0
    %v482 = vsel %vm75, %v368, 0
    %484 = vmatprep.subr.mxu0 0.0
    %485 = vmatpush1.msra.mxu0 %v353
    %486 = vmatprep.subr.mxu0 0.0
    %487 = vmatpush1.msra.mxu0 %v358
    %488 = vmatprep.subr.mxu0 0.0
    %489 = vmatpush1.msra.mxu0 %v363
    %490 = vmatprep.subr.mxu0 0.0
    %491 = vmatpush1.msra.mxu0 %v368
    %492 = vmatprep.subr.mxu0 0.0
    %493 = vmatpush1.msra.mxu0 0.0
    %494 = vmatprep.subr.mxu0 0.0
    %495 = vmatpush1.msra.mxu0 0.0
    %496 = vmatprep.subr.mxu0 0.0
    %497 = vmatpush1.msra.mxu0 0.0
    %498 = vmatprep.subr.mxu0 0.0
    %499 = vmatpush1.msra.mxu0 0.0
    %500 = vmatprep.subr.mxu0 0.0
    %501 = vmatpush1.msra.mxu0 0.0
    %502 = vmatprep.subr.mxu0 0.0
    %503 = vmatpush1.msra.mxu0 0.0
    %504 = vmatprep.subr.mxu0 0.0
    %505 = vmatpush1.msra.mxu0 0.0
    %506 = vmatprep.subr.mxu0 0.0
    %507 = vmatpush1.msra.mxu0 0.0
    %508 = vmatprep.subr.mxu0 0.0
    %509 = vmatpush1.msra.mxu0 0.0
    %510 = vmatprep.subr.mxu0 0.0
    %511 = vmatpush1.msra.mxu0 0.0
    %512 = vmatprep.subr.mxu0 0.0
    %513 = vmatpush1.msra.mxu0 0.0
    %514 = vmatprep.subr.mxu0 0.0
    %515 = vmatpush1.msra.mxu0 0.0
    %516 = vmatprep.subr.mxu0 0.0
    %517 = vmatpush1.msra.mxu0 0.0
    %518 = vmatprep.subr.mxu0 0.0
    %519 = vmatpush1.msra.mxu0 0.0
    %520 = vmatprep.subr.mxu0 0.0
    %521 = vmatpush1.msra.mxu0 0.0
    %522 = vmatprep.subr.mxu0 0.0
    %523 = vmatpush1.msra.mxu0 0.0
    %524 = vmatprep.subr.mxu0 0.0
    %525 = vmatpush1.msra.mxu0 0.0
    %526 = vmatprep.subr.mxu0 0.0
    %527 = vmatpush1.msra.mxu0 0.0
    %528 = vmatprep.subr.mxu0 0.0
    %529 = vmatpush1.msra.mxu0 0.0
    %530 = vmatprep.subr.mxu0 0.0
    %531 = vmatpush1.msra.mxu0 0.0
    %532 = vmatprep.subr.mxu0 0.0
    %533 = vmatpush1.msra.mxu0 0.0
    %534 = vmatprep.subr.mxu0 0.0
    %535 = vmatpush1.msra.mxu0 0.0
    %536 = vmatprep.subr.mxu0 0.0
    %537 = vmatpush1.msra.mxu0 0.0
    %538 = vmatprep.subr.mxu0 0.0
    %539 = vmatpush1.msra.mxu0 0.0
    %540 = vmatprep.subr.mxu0 0.0
    %541 = vmatpush1.msra.mxu0 0.0
    %542 = vmatprep.subr.mxu0 0.0
    %543 = vmatpush1.msra.mxu0 0.0
    %544 = vmatprep.subr.mxu0 0.0
    %545 = vmatpush1.msra.mxu0 0.0
    %546 = vmatprep.subr.mxu0 0.0
    %547 = vmatpush1.msra.mxu0 0.0
    %548 = vmatprep.mubr.f32.mxu0 0.0
    %549 = vmatmul.mubr.f32.gmra.mrb[0].mxu0 %v473
    %v550 = vpop.f32.mrb[0].mxu0
    %v551 = vadd.f32 0.0, %v550
    %v552 = vpop.f32.mrb[0].mxu0
    %553 = vmatprep.mubr.f32.mxu0 0.0
    %554 = vmatmul.mubr.f32.gmra.mrb[0].mxu0 %v476
    %v555 = vpop.f32.mrb[0].mxu0
    %v556 = vadd.f32 0.0, %v555
    %v557 = vpop.f32.mrb[0].mxu0
    %558 = vmatprep.mubr.f32.mxu0 0.0
    %559 = vmatmul.mubr.f32.gmra.mrb[0].mxu0 %v479
    %v560 = vpop.f32.mrb[0].mxu0
    %v561 = vadd.f32 0.0, %v560
    %v562 = vpop.f32.mrb[0].mxu0
    %563 = vmatprep.mubr.f32.mxu0 0.0
    %564 = vmatmul.mubr.f32.gmra.mrb[0].mxu0 %v482
    %v565 = vpop.f32.mrb[0].mxu0
    %v566 = vadd.f32 0.0, %v565
    %v567 = vpop.f32.mrb[0].mxu0
    %568 = vdwg.mxu0
    %v570 = vsel %vm75, %v468, 0
    %v573 = vsel %vm75, %v469, 0
    %v576 = vsel %vm75, %v470, 0
    %v579 = vsel %vm75, %v471, 0
    %581 = vmatprep.subr.mxu0 0.0
    %582 = vmatpush1.msra.mxu0 %v551
    %583 = vmatprep.subr.mxu0 0.0
    %584 = vmatpush1.msra.mxu0 %v556
    %585 = vmatprep.subr.mxu0 0.0
    %586 = vmatpush1.msra.mxu0 %v561
    %587 = vmatprep.subr.mxu0 0.0
    %588 = vmatpush1.msra.mxu0 %v566
    %589 = vmatprep.subr.mxu0 0.0
    %590 = vmatpush1.msra.mxu0 0.0
    %591 = vmatprep.subr.mxu0 0.0
    %592 = vmatpush1.msra.mxu0 0.0
    %593 = vmatprep.subr.mxu0 0.0
    %594 = vmatpush1.msra.mxu0 0.0
    %595 = vmatprep.subr.mxu0 0.0
    %596 = vmatpush1.msra.mxu0 0.0
    %597 = vmatprep.subr.mxu0 0.0
    %598 = vmatpush1.msra.mxu0 0.0
    %599 = vmatprep.subr.mxu0 0.0
    %600 = vmatpush1.msra.mxu0 0.0
    %601 = vmatprep.subr.mxu0 0.0
    %602 = vmatpush1.msra.mxu0 0.0
    %603 = vmatprep.subr.mxu0 0.0
    %604 = vmatpush1.msra.mxu0 0.0
    %605 = vmatprep.subr.mxu0 0.0
    %606 = vmatpush1.msra.mxu0 0.0
    %607 = vmatprep.subr.mxu0 0.0
    %608 = vmatpush1.msra.mxu0 0.0
    %609 = vmatprep.subr.mxu0 0.0
    %610 = vmatpush1.msra.mxu0 0.0
    %611 = vmatprep.subr.mxu0 0.0
    %612 = vmatpush1.msra.mxu0 0.0
    %613 = vmatprep.subr.mxu0 0.0
    %614 = vmatpush1.msra.mxu0 0.0
    %615 = vmatprep.subr.mxu0 0.0
    %616 = vmatpush1.msra.mxu0 0.0
    %617 = vmatprep.subr.mxu0 0.0
    %618 = vmatpush1.msra.mxu0 0.0
    %619 = vmatprep.subr.mxu0 0.0
    %620 = vmatpush1.msra.mxu0 0.0
    %621 = vmatprep.subr.mxu0 0.0
    %622 = vmatpush1.msra.mxu0 0.0
    %623 = vmatprep.subr.mxu0 0.0
    %624 = vmatpush1.msra.mxu0 0.0
    %625 = vmatprep.subr.mxu0 0.0
    %626 = vmatpush1.msra.mxu0 0.0
    %627 = vmatprep.subr.mxu0 0.0
    %628 = vmatpush1.msra.mxu0 0.0
    %629 = vmatprep.subr.mxu0 0.0
    %630 = vmatpush1.msra.mxu0 0.0
    %631 = vmatprep.subr.mxu0 0.0
    %632 = vmatpush1.msra.mxu0 0.0
    %633 = vmatprep.subr.mxu0 0.0
    %634 = vmatpush1.msra.mxu0 0.0
    %635 = vmatprep.subr.mxu0 0.0
    %636 = vmatpush1.msra.mxu0 0.0
    %637 = vmatprep.subr.mxu0 0.0
    %638 = vmatpush1.msra.mxu0 0.0
    %639 = vmatprep.subr.mxu0 0.0
    %640 = vmatpush1.msra.mxu0 0.0
    %641 = vmatprep.subr.mxu0 0.0
    %642 = vmatpush1.msra.mxu0 0.0
    %643 = vmatprep.subr.mxu0 0.0
    %644 = vmatpush1.msra.mxu0 0.0
    %645 = vmatprep.mubr.f32.mxu0 0.0
    %646 = vmatmul.mubr.f32.gmra.mrb[0].mxu0 %v570
    %v647 = vpop.f32.mrb[0].mxu0
    %v648 = vadd.f32 0.0, %v647
    %v649 = vpop.f32.mrb[0].mxu0
    %650 = vmatprep.mubr.f32.mxu0 0.0
    %651 = vmatmul.mubr.f32.gmra.mrb[0].mxu0 %v573
    %v652 = vpop.f32.mrb[0].mxu0
    %v653 = vadd.f32 0.0, %v652
    %v654 = vpop.f32.mrb[0].mxu0
    %655 = vmatprep.mubr.f32.mxu0 0.0
    %656 = vmatmul.mubr.f32.gmra.mrb[0].mxu0 %v576
    %v657 = vpop.f32.mrb[0].mxu0
    %v658 = vadd.f32 0.0, %v657
    %v659 = vpop.f32.mrb[0].mxu0
    %660 = vmatprep.mubr.f32.mxu0 0.0
    %661 = vmatmul.mubr.f32.gmra.mrb[0].mxu0 %v579
    %v662 = vpop.f32.mrb[0].mxu0
    %v663 = vadd.f32 0.0, %v662
    %v664 = vpop.f32.mrb[0].mxu0
    %665 = vdwg.mxu0
    %v666 = vadd.f32 %v468, %v648
    %v667 = vadd.f32 %v469, %v653
    %v668 = vadd.f32 %v470, %v658
    %v669 = vadd.f32 %v471, %v663
    %v671 = vsel %vm75, %v551, 0
    %v674 = vsel %vm75, %v556, 0
    %v677 = vsel %vm75, %v561, 0
    %v680 = vsel %vm75, %v566, 0
    %682 = vmatprep.subr.mxu0 0.0
    %683 = vmatpush1.msra.mxu0 %v551
    %684 = vmatprep.subr.mxu0 0.0
    %685 = vmatpush1.msra.mxu0 %v556
    %686 = vmatprep.subr.mxu0 0.0
    %687 = vmatpush1.msra.mxu0 %v561
    %688 = vmatprep.subr.mxu0 0.0
    %689 = vmatpush1.msra.mxu0 %v566
    %690 = vmatprep.subr.mxu0 0.0
    %691 = vmatpush1.msra.mxu0 0.0
    %692 = vmatprep.subr.mxu0 0.0
    %693 = vmatpush1.msra.mxu0 0.0
    %694 = vmatprep.subr.mxu0 0.0
    %695 = vmatpush1.msra.mxu0 0.0
    %696 = vmatprep.subr.mxu0 0.0
    %697 = vmatpush1.msra.mxu0 0.0
    %698 = vmatprep.subr.mxu0 0.0
    %699 = vmatpush1.msra.mxu0 0.0
    %700 = vmatprep.subr.mxu0 0.0
    %701 = vmatpush1.msra.mxu0 0.0
    %702 = vmatprep.subr.mxu0 0.0
    %703 = vmatpush1.msra.mxu0 0.0
    %704 = vmatprep.subr.mxu0 0.0
    %705 = vmatpush1.msra.mxu0 0.0
    %706 = vmatprep.subr.mxu0 0.0
    %707 = vmatpush1.msra.mxu0 0.0
    %708 = vmatprep.subr.mxu0 0.0
    %709 = vmatpush1.msra.mxu0 0.0
    %710 = vmatprep.subr.mxu0 0.0
    %711 = vmatpush1.msra.mxu0 0.0
    %712 = vmatprep.subr.mxu0 0.0
    %713 = vmatpush1.msra.mxu0 0.0
    %714 = vmatprep.subr.mxu0 0.0
    %715 = vmatpush1.msra.mxu0 0.0
    %716 = vmatprep.subr.mxu0 0.0
    %717 = vmatpush1.msra.mxu0 0.0
    %718 = vmatprep.subr.mxu0 0.0
    %719 = vmatpush1.msra.mxu0 0.0
    %720 = vmatprep.subr.mxu0 0.0
    %721 = vmatpush1.msra.mxu0 0.0
    %722 = vmatprep.subr.mxu0 0.0
    %723 = vmatpush1.msra.mxu0 0.0
    %724 = vmatprep.subr.mxu0 0.0
    %725 = vmatpush1.msra.mxu0 0.0
    %726 = vmatprep.subr.mxu0 0.0
    %727 = vmatpush1.msra.mxu0 0.0
    %728 = vmatprep.subr.mxu0 0.0
    %729 = vmatpush1.msra.mxu0 0.0
    %730 = vmatprep.subr.mxu0 0.0
    %731 = vmatpush1.msra.mxu0 0.0
    %732 = vmatprep.subr.mxu0 0.0
    %733 = vmatpush1.msra.mxu0 0.0
    %734 = vmatprep.subr.mxu0 0.0
    %735 = vmatpush1.msra.mxu0 0.0
    %736 = vmatprep.subr.mxu0 0.0
    %737 = vmatpush1.msra.mxu0 0.0
    %738 = vmatprep.subr.mxu0 0.0
    %739 = vmatpush1.msra.mxu0 0.0
    %740 = vmatprep.subr.mxu0 0.0
    %741 = vmatpush1.msra.mxu0 0.0
    %742 = vmatprep.subr.mxu0 0.0
    %743 = vmatpush1.msra.mxu0 0.0
    %744 = vmatprep.subr.mxu0 0.0
    %745 = vmatpush1.msra.mxu0 0.0
    %746 = vmatprep.mubr.f32.mxu0 0.0
    %747 = vmatmul.mubr.f32.gmra.mrb[0].mxu0 %v671
    %v748 = vpop.f32.mrb[0].mxu0
    %v749 = vadd.f32 0.0, %v748
    %v750 = vpop.f32.mrb[0].mxu0
    %751 = vmatprep.mubr.f32.mxu0 0.0
    %752 = vmatmul.mubr.f32.gmra.mrb[0].mxu0 %v674
    %v753 = vpop.f32.mrb[0].mxu0
    %v754 = vadd.f32 0.0, %v753
    %v755 = vpop.f32.mrb[0].mxu0
    %756 = vmatprep.mubr.f32.mxu0 0.0
    %757 = vmatmul.mubr.f32.gmra.mrb[0].mxu0 %v677
    %v758 = vpop.f32.mrb[0].mxu0
    %v759 = vadd.f32 0.0, %v758
    %v760 = vpop.f32.mrb[0].mxu0
    %761 = vmatprep.mubr.f32.mxu0 0.0
    %762 = vmatmul.mubr.f32.gmra.mrb[0].mxu0 %v680
    %v763 = vpop.f32.mrb[0].mxu0
    %v764 = vadd.f32 0.0, %v763
    %v765 = vpop.f32.mrb[0].mxu0
    %766 = vdwg.mxu0
    %v768 = vsel %vm75, %v666, 0
    %v771 = vsel %vm75, %v667, 0
    %v774 = vsel %vm75, %v668, 0
    %v777 = vsel %vm75, %v669, 0
    %779 = vmatprep.subr.mxu0 0.0
    %780 = vmatpush1.msra.mxu0 %v749
    %781 = vmatprep.subr.mxu0 0.0
    %782 = vmatpush1.msra.mxu0 %v754
    %783 = vmatprep.subr.mxu0 0.0
    %784 = vmatpush1.msra.mxu0 %v759
    %785 = vmatprep.subr.mxu0 0.0
    %786 = vmatpush1.msra.mxu0 %v764
    %787 = vmatprep.subr.mxu0 0.0
    %788 = vmatpush1.msra.mxu0 0.0
    %789 = vmatprep.subr.mxu0 0.0
    %790 = vmatpush1.msra.mxu0 0.0
    %791 = vmatprep.subr.mxu0 0.0
    %792 = vmatpush1.msra.mxu0 0.0
    %793 = vmatprep.subr.mxu0 0.0
    %794 = vmatpush1.msra.mxu0 0.0
    %795 = vmatprep.subr.mxu0 0.0
    %796 = vmatpush1.msra.mxu0 0.0
    %797 = vmatprep.subr.mxu0 0.0
    %798 = vmatpush1.msra.mxu0 0.0
    %799 = vmatprep.subr.mxu0 0.0
    %800 = vmatpush1.msra.mxu0 0.0
    %801 = vmatprep.subr.mxu0 0.0
    %802 = vmatpush1.msra.mxu0 0.0
    %803 = vmatprep.subr.mxu0 0.0
    %804 = vmatpush1.msra.mxu0 0.0
    %805 = vmatprep.subr.mxu0 0.0
    %806 = vmatpush1.msra.mxu0 0.0
    %807 = vmatprep.subr.mxu0 0.0
    %808 = vmatpush1.msra.mxu0 0.0
    %809 = vmatprep.subr.mxu0 0.0
    %810 = vmatpush1.msra.mxu0 0.0
    %811 = vmatprep.subr.mxu0 0.0
    %812 = vmatpush1.msra.mxu0 0.0
    %813 = vmatprep.subr.mxu0 0.0
    %814 = vmatpush1.msra.mxu0 0.0
    %815 = vmatprep.subr.mxu0 0.0
    %816 = vmatpush1.msra.mxu0 0.0
    %817 = vmatprep.subr.mxu0 0.0
    %818 = vmatpush1.msra.mxu0 0.0
    %819 = vmatprep.subr.mxu0 0.0
    %820 = vmatpush1.msra.mxu0 0.0
    %821 = vmatprep.subr.mxu0 0.0
    %822 = vmatpush1.msra.mxu0 0.0
    %823 = vmatprep.subr.mxu0 0.0
    %824 = vmatpush1.msra.mxu0 0.0
    %825 = vmatprep.subr.mxu0 0.0
    %826 = vmatpush1.msra.mxu0 0.0
    %827 = vmatprep.subr.mxu0 0.0
    %828 = vmatpush1.msra.mxu0 0.0
    %829 = vmatprep.subr.mxu0 0.0
    %830 = vmatpush1.msra.mxu0 0.0
    %831 = vmatprep.subr.mxu0 0.0
    %832 = vmatpush1.msra.mxu0 0.0
    %833 = vmatprep.subr.mxu0 0.0
    %834 = vmatpush1.msra.mxu0 0.0
    %835 = vmatprep.subr.mxu0 0.0
    %836 = vmatpush1.msra.mxu0 0.0
    %837 = vmatprep.subr.mxu0 0.0
    %838 = vmatpush1.msra.mxu0 0.0
    %839 = vmatprep.subr.mxu0 0.0
    %840 = vmatpush1.msra.mxu0 0.0
    %841 = vmatprep.subr.mxu0 0.0
    %842 = vmatpush1.msra.mxu0 0.0
    %843 = vmatprep.mubr.f32.mxu0 0.0
    %844 = vmatmul.mubr.f32.gmra.mrb[0].mxu0 %v768
    %v845 = vpop.f32.mrb[0].mxu0
    %v846 = vadd.f32 0.0, %v845
    %v847 = vpop.f32.mrb[0].mxu0
    %848 = vmatprep.mubr.f32.mxu0 0.0
    %849 = vmatmul.mubr.f32.gmra.mrb[0].mxu0 %v771
    %v850 = vpop.f32.mrb[0].mxu0
    %v851 = vadd.f32 0.0, %v850
    %v852 = vpop.f32.mrb[0].mxu0
    %853 = vmatprep.mubr.f32.mxu0 0.0
    %854 = vmatmul.mubr.f32.gmra.mrb[0].mxu0 %v774
    %v855 = vpop.f32.mrb[0].mxu0
    %v856 = vadd.f32 0.0, %v855
    %v857 = vpop.f32.mrb[0].mxu0
    %858 = vmatprep.mubr.f32.mxu0 0.0
    %859 = vmatmul.mubr.f32.gmra.mrb[0].mxu0 %v777
    %v860 = vpop.f32.mrb[0].mxu0
    %v861 = vadd.f32 0.0, %v860
    %v862 = vpop.f32.mrb[0].mxu0
    %863 = vdwg.mxu0
    %v864 = vadd.f32 %v666, %v846
    %v865 = vadd.f32 %v667, %v851
    %v866 = vadd.f32 %v668, %v856
    %v867 = vadd.f32 %v669, %v861
    %v868 = vld [vmem:[#allocation5] sm:$0xff]
    %v869 = vld [vmem:[#allocation5 + $0x8] sm:$0xff]
    %v871 = vsel %vm75, %v868, 0
    %v874 = vsel %vm75, %v869, 0
    %876 = vmatprep.subr.mxu0 0.0
    %877 = vmatpush1.msra.mxu0 %v864
    %878 = vmatprep.subr.mxu0 0.0
    %879 = vmatpush1.msra.mxu0 %v865
    %880 = vmatprep.subr.mxu0 0.0
    %881 = vmatpush1.msra.mxu0 %v866
    %882 = vmatprep.subr.mxu0 0.0
    %883 = vmatpush1.msra.mxu0 %v867
    %884 = vmatprep.subr.mxu0 0.0
    %885 = vmatpush1.msra.mxu0 0.0
    %886 = vmatprep.subr.mxu0 0.0
    %887 = vmatpush1.msra.mxu0 0.0
    %888 = vmatprep.subr.mxu0 0.0
    %889 = vmatpush1.msra.mxu0 0.0
    %890 = vmatprep.subr.mxu0 0.0
    %891 = vmatpush1.msra.mxu0 0.0
    %892 = vmatprep.subr.mxu0 0.0
    %893 = vmatpush1.msra.mxu0 0.0
    %894 = vmatprep.subr.mxu0 0.0
    %895 = vmatpush1.msra.mxu0 0.0
    %896 = vmatprep.subr.mxu0 0.0
    %897 = vmatpush1.msra.mxu0 0.0
    %898 = vmatprep.subr.mxu0 0.0
    %899 = vmatpush1.msra.mxu0 0.0
    %900 = vmatprep.subr.mxu0 0.0
    %901 = vmatpush1.msra.mxu0 0.0
    %902 = vmatprep.subr.mxu0 0.0
    %903 = vmatpush1.msra.mxu0 0.0
    %904 = vmatprep.subr.mxu0 0.0
    %905 = vmatpush1.msra.mxu0 0.0
    %906 = vmatprep.subr.mxu0 0.0
    %907 = vmatpush1.msra.mxu0 0.0
    %908 = vmatprep.subr.mxu0 0.0
    %909 = vmatpush1.msra.mxu0 0.0
    %910 = vmatprep.subr.mxu0 0.0
    %911 = vmatpush1.msra.mxu0 0.0
    %912 = vmatprep.subr.mxu0 0.0
    %913 = vmatpush1.msra.mxu0 0.0
    %914 = vmatprep.subr.mxu0 0.0
    %915 = vmatpush1.msra.mxu0 0.0
    %916 = vmatprep.subr.mxu0 0.0
    %917 = vmatpush1.msra.mxu0 0.0
    %918 = vmatprep.subr.mxu0 0.0
    %919 = vmatpush1.msra.mxu0 0.0
    %920 = vmatprep.subr.mxu0 0.0
    %921 = vmatpush1.msra.mxu0 0.0
    %922 = vmatprep.subr.mxu0 0.0
    %923 = vmatpush1.msra.mxu0 0.0
    %924 = vmatprep.subr.mxu0 0.0
    %925 = vmatpush1.msra.mxu0 0.0
    %926 = vmatprep.subr.mxu0 0.0
    %927 = vmatpush1.msra.mxu0 0.0
    %928 = vmatprep.subr.mxu0 0.0
    %929 = vmatpush1.msra.mxu0 0.0
    %930 = vmatprep.subr.mxu0 0.0
    %931 = vmatpush1.msra.mxu0 0.0
    %932 = vmatprep.subr.mxu0 0.0
    %933 = vmatpush1.msra.mxu0 0.0
    %934 = vmatprep.subr.mxu0 0.0
    %935 = vmatpush1.msra.mxu0 0.0
    %936 = vmatprep.subr.mxu0 0.0
    %937 = vmatpush1.msra.mxu0 0.0
    %938 = vmatprep.subr.mxu0 0.0
    %939 = vmatpush1.msra.mxu0 0.0
    %940 = vmatprep.mubr.f32.mxu0 0.0
    %941 = vmatmul.mubr.f32.gmra.mrb[0].mxu0 %v871
    %v942 = vpop.f32.mrb[0].mxu0
    %v943 = vadd.f32 0.0, %v942
    %v944 = vpop.f32.mrb[0].mxu0
    %945 = vmatprep.mubr.f32.mxu0 0.0
    %946 = vmatmul.mubr.f32.gmra.mrb[0].mxu0 %v874
    %v947 = vpop.f32.mrb[0].mxu0
    %v948 = vadd.f32 0.0, %v947
    %v949 = vpop.f32.mrb[0].mxu0
    %950 = vdwg.mxu0
    %951 = vst.msk [vmem:[#allocation7] sm:$0xff] %vm75, %v943
    %952 = vst.msk [vmem:[#allocation7 + $0x8] sm:$0xff] %vm75, %v948
    // Predicated region
    $region18: #{tpu_custom_call.1} parent=1 // pred_check
      _
    $region19: #{tpu_custom_call.1} parent=1 // pred_check_branch
      %954 = sbr.rel (0) target = $region21
    $region20: #{tpu_custom_call.1} parent=1 // pred_region
      %s956 = ssub.s32 256, 256
      %957 = vsyncadd [#allocation4], %s956
      %s958 = sshll.u32 [#allocation7], 4
      %s959 = int_to_ptr.vmem [resolvable:$true] %s958
      %964 = dma.vmem_to_hbm [thread:$0]  %s959, 256, %s2, [#allocation4], 128, 128, 8
    $region21: #{tpu_custom_call.1} parent=1 // pred_fallthru
      _
    // Predicated region
    $region22: #{tpu_custom_call.1} parent=1 // pred_check
      _
    $region23: #{tpu_custom_call.1} parent=1 // pred_check_branch
      %966 = sbr.rel (0) target = $region25
    $region24: #{tpu_custom_call.1} parent=1 // pred_region
      %967 = dma.done [#allocation4], 256
    $region25: #{tpu_custom_call.1} parent=1 // pred_fallthru
      _
    %968 = vsyncpa [#allocation3], 1
    %969 = vsyncpa [#allocation6], 1
    %970 = vsyncpa [#allocation4], 1

</llo_original>
